<compile_context>
chip_gen: v6e
topology: v6e:2x2x1
jax: 0.10.0
libtpu: 0.0.40
codegen_flags: <defaults>
</compile_context>

<pallas_src>
import math

import jax
import jax.numpy as jnp
from jax.experimental import pallas as pl
from jax.experimental.pallas import tpu as pltpu

_INV_SQRT2 = 1.0 / math.sqrt(2.0)


def _gelu_exact(h):
    """Exact (erf-based) GELU in f32 — matches torch.nn.GELU() default."""
    # TODO(synk): a tanh-approx GELU would move the transcendental to the EUP
    # slot (big VALU win on v5e), but it would not match nn.GELU() exactly.
    return 0.5 * h * (1.0 + jax.lax.erf(h * jnp.float32(_INV_SQRT2)))


# ----------------------------- kernel bodies --------------------------------

def _mlp_resident_kernel(x_ref, w1_ref, b1_ref, w2_ref, b2_ref, o_ref):
    """Whole w1/w2 resident in VMEM; 1-D grid over token tiles (no reduction)."""
    h = jnp.dot(x_ref[...], w1_ref[...], preferred_element_type=jnp.float32)
    h = _gelu_exact(h + b1_ref[...].astype(jnp.float32))
    out = jnp.dot(h.astype(w2_ref.dtype), w2_ref[...],
                  preferred_element_type=jnp.float32)
    o_ref[...] = (out + b2_ref[...].astype(jnp.float32)).astype(o_ref.dtype)


def _mlp_stream_kernel_f32(x_ref, w1_ref, b1_ref, w2_ref, b2_ref, o_ref):
    """H-chunk streaming; f32 output accumulates directly in the resident o tile."""
    k = pl.program_id(1)
    h = jnp.dot(x_ref[...], w1_ref[...], preferred_element_type=jnp.float32)
    h = _gelu_exact(h + b1_ref[...].astype(jnp.float32))
    p = jnp.dot(h.astype(w2_ref.dtype), w2_ref[...],
                preferred_element_type=jnp.float32)

    @pl.when(k == 0)
    def _():
        o_ref[...] = p + b2_ref[...].astype(jnp.float32)

    @pl.when(k != 0)
    def _():
        o_ref[...] += p


def _mlp_stream_kernel_acc(x_ref, w1_ref, b1_ref, w2_ref, b2_ref, o_ref, acc_ref):
    """H-chunk streaming; non-f32 output keeps an f32 scratch accumulator."""
    k = pl.program_id(1)

    @pl.when(k == 0)
    def _():
        acc_ref[...] = jnp.zeros_like(acc_ref)

    h = jnp.dot(x_ref[...], w1_ref[...], preferred_element_type=jnp.float32)
    h = _gelu_exact(h + b1_ref[...].astype(jnp.float32))
    acc_ref[...] += jnp.dot(h.astype(w2_ref.dtype), w2_ref[...],
                            preferred_element_type=jnp.float32)

    @pl.when(k == pl.num_programs(1) - 1)
    def _():
        o_ref[...] = (acc_ref[...]
                      + b2_ref[...].astype(jnp.float32)).astype(o_ref.dtype)


# ------------------------------- helpers -------------------------------------

def _round_up(v, m):
    return ((v + m - 1) // m) * m


def _vmem_capacity_bytes():
    """Physical VMEM per TensorCore; conservative default = v7x's 64 MiB."""
    cap = 64 * 1024 * 1024
    try:
        info = pltpu.get_tpu_info()
        cap = int(getattr(info, "vmem_capacity_bytes", cap))
    except Exception:
        pass
    return cap


def _spec(block_shape, index_map, *, buffers=None):
    """BlockSpec; single-buffered when the block index never changes."""
    if buffers is not None:
        try:
            return pl.BlockSpec(block_shape, index_map,
                                pipeline_mode=pl.Buffered(buffers))
        except TypeError:  # older jax without pipeline_mode — keep defaults
            pass
    return pl.BlockSpec(block_shape, index_map)


def _pick_th(H, target=1024):
    """Largest multiple-of-128 divisor of H that is <= target (else full H)."""
    for cand in range(min(target, (H // 128) * 128), 0, -128):
        if H % cand == 0:
            return cand
    return H  # full-extent block satisfies the (8,128) constraint


# ------------------------------- wrapper --------------------------------------

def mlp_pallas(x, w1, b1, w2, b2, *, tm=None, th=None, mode=None):
    """x: [B, N, C]; w1: [C, H]; b1: [H]; w2: [H, O]; b2: [O] -> [B, N, O].

    mode: None (auto), "resident" (weights fully VMEM-resident, 1-D grid over
    tokens) or "stream" (H chunked as the innermost reduction axis).
    """
    B, N, C = x.shape
    H = w1.shape[1]
    O = w2.shape[1]
    M = B * N
    out_dtype = x.dtype

    x2 = x.reshape(M, C)
    b1_2 = b1.reshape(1, H)
    b2_2 = b2.reshape(1, O)

    isz = lambda a: a.dtype.itemsize
    w_bytes = (w1.size * isz(w1) + b1.size * isz(b1)
               + w2.size * isz(w2) + b2.size * isz(b2))

    vmem_cap = _vmem_capacity_bytes()
    # Compiler budget: headroom under the physical per-core VMEM
    # (v5e/v6e: 128 MiB -> ~108 MiB; v7x: 64 MiB -> ~54 MiB).
    vmem_limit = int(vmem_cap * 0.85)
    # Our sizing estimate leaves further slack for Mosaic internal scratch.
    fit_budget = int(vmem_limit * 0.85)

    def _resident_bytes(tm_):
        # single-buffered resident weights + double-buffered x / out tiles
        # + the (tm, H) f32 hidden activation and its cast copy for fc2.
        return (w_bytes
                + 2 * tm_ * C * isz(x)
                + 2 * tm_ * O * out_dtype.itemsize
                + tm_ * H * 4
                + tm_ * H * isz(w2))

    def _auto_resident_tm():
        for cand in (2048, 1024, 512, 256, 128, 64, 32, 16, 8):
            t = min(cand, M)
            if _resident_bytes(t) <= fit_budget:
                return t
        return None

    if mode is None:
        mode = "resident" if _auto_resident_tm() is not None else "stream"

    if mode == "resident":
        tm_eff = min(tm, M) if tm is not None else (_auto_resident_tm() or min(128, M))
        # Megacore: give both TensorCores at least one token tile when possible.
        if M >= 16 and pl.cdiv(M, tm_eff) < 2:
            tm_eff = _round_up((M + 1) // 2, 8)
        if tm_eff < M and tm_eff % 8:
            tm_eff = _round_up(tm_eff, 8)   # (8,128) sublane constraint

        grid = (pl.cdiv(M, tm_eff),)
        kernel = _mlp_resident_kernel
        in_specs = [
            pl.BlockSpec((tm_eff, C), lambda i: (i, 0)),
            # Constant block index + single buffer -> DMA'd from HBM exactly once.
            _spec((C, H), lambda i: (0, 0), buffers=1),
            _spec((1, H), lambda i: (0, 0), buffers=1),
            _spec((H, O), lambda i: (0, 0), buffers=1),
            _spec((1, O), lambda i: (0, 0), buffers=1),
        ]
        out_specs = pl.BlockSpec((tm_eff, O), lambda i: (i, 0))
        scratch_shapes = []
        dim_sem = ("parallel",)
        weight_hbm_bytes = w_bytes                      # each weight read once
    else:
        # ---- streaming: H chunked as the innermost reduction axis ----
        if th is None or H % th != 0 or (th != H and th % 128 != 0):
            th = _pick_th(H)
        n_k = H // th

        def _stream_bytes(tm_):
            b = (2 * tm_ * C * isz(x)
                 + 2 * C * th * isz(w1)
                 + 2 * th * isz(b1)
                 + 2 * th * O * isz(w2)
                 + O * isz(b2)
                 + 2 * tm_ * O * out_dtype.itemsize
                 + tm_ * th * 4 + tm_ * th * isz(w2))
            if out_dtype != jnp.float32:
                b += tm_ * O * 4                        # scratch accumulator
            return b

        if tm is None:
            tm_eff = min(128, M)
            for cand in (2048, 1024, 512, 256, 128):
                t = min(cand, M)
                if _stream_bytes(t) <= fit_budget:
                    tm_eff = t
                    break
        else:
            tm_eff = min(tm, M)
        if M >= 16 and pl.cdiv(M, tm_eff) < 2:
            tm_eff = _round_up((M + 1) // 2, 8)
        if tm_eff < M and tm_eff % 8:
            tm_eff = _round_up(tm_eff, 8)

        grid = (pl.cdiv(M, tm_eff), n_k)
        in_specs = [
            pl.BlockSpec((tm_eff, C), lambda i, k: (i, 0)),
            pl.BlockSpec((C, th), lambda i, k: (0, k)),
            pl.BlockSpec((1, th), lambda i, k: (0, k)),
            pl.BlockSpec((th, O), lambda i, k: (k, 0)),
            _spec((1, O), lambda i, k: (0, 0), buffers=1),
        ]
        # Same output block across k -> stays resident for the whole reduction.
        out_specs = pl.BlockSpec((tm_eff, O), lambda i, k: (i, 0))
        dim_sem = ("parallel", "arbitrary")
        if out_dtype == jnp.float32:
            kernel = _mlp_stream_kernel_f32
            scratch_shapes = []
        else:
            kernel = _mlp_stream_kernel_acc
            scratch_shapes = [pltpu.VMEM((tm_eff, O), jnp.float32)]
        n_m_tiles = pl.cdiv(M, tm_eff)
        weight_hbm_bytes = (n_m_tiles * (w1.size * isz(w1) + b1.size * isz(b1)
                                         + w2.size * isz(w2))
                            + b2.size * isz(b2))

    flops = 2 * M * C * H + 2 * M * H * O
    bytes_accessed = (M * C * isz(x) + M * O * out_dtype.itemsize
                      + weight_hbm_bytes)

    out2 = pl.pallas_call(
        kernel,
        out_shape=jax.ShapeDtypeStruct((M, O), out_dtype),
        grid=grid,
        in_specs=in_specs,
        out_specs=out_specs,
        scratch_shapes=scratch_shapes,
        compiler_params=pltpu.CompilerParams(
            dimension_semantics=dim_sem,
            vmem_limit_bytes=vmem_limit,
        ),
        cost_estimate=pl.CostEstimate(
            flops=flops, transcendentals=M * H, bytes_accessed=bytes_accessed),
    )(x2, w1, b1_2, w2, b2_2)
    return out2.reshape(B, N, O)


# -------------------------- reference & params --------------------------------

def init_params(key, in_features, hidden_features, out_features, dtype=jnp.float32):
    """Deterministic init mimicking nn.Linear default (uniform +/- 1/sqrt(fan_in))."""
    k1, k2, k3, k4 = jax.random.split(key, 4)
    bound1 = 1.0 / math.sqrt(in_features)
    bound2 = 1.0 / math.sqrt(hidden_features)
    w1 = jax.random.uniform(k1, (in_features, hidden_features), dtype, -bound1, bound1)
    b1 = jax.random.uniform(k2, (hidden_features,), dtype, -bound1, bound1)
    w2 = jax.random.uniform(k3, (hidden_features, out_features), dtype, -bound2, bound2)
    b2 = jax.random.uniform(k4, (out_features,), dtype, -bound2, bound2)
    return w1, b1, w2, b2


def mlp_reference(x, w1, b1, w2, b2):
    """Plain-JAX reference (same math as the PyTorch module), computed in f32."""
    h = x.astype(jnp.float32) @ w1.astype(jnp.float32) + b1.astype(jnp.float32)
    h = 0.5 * h * (1.0 + jax.lax.erf(h * jnp.float32(_INV_SQRT2)))
    return h @ w2.astype(jnp.float32) + b2.astype(jnp.float32)


if __name__ == "__main__":
    # Small ViT-style shapes, lane-dense (last dims multiples of 128):
    # batch=2, tokens=16, in_features=128, hidden=256, out_features=128.
    B, N, C, Hd = 2, 16, 128, 256
    key = jax.random.PRNGKey(0)
    kx, kp = jax.random.split(key)
    x = jax.random.normal(kx, (B, N, C), jnp.float32)
    w1, b1, w2, b2 = init_params(kp, C, Hd, C)

    ref = mlp_reference(x, w1, b1, w2, b2)

    # (1) Auto mode: weights fit VMEM -> resident, single-buffered, 1-D grid
    #     over >=2 token tiles (megacore-friendly).
    out = jax.block_until_ready(mlp_pallas(x, w1, b1, w2, b2))
    assert out.shape == (B, N, C)
    assert jnp.allclose(out, ref, atol=1e-5, rtol=1e-5)

    # (2) Forced H-chunked streaming path (f32 output accumulates into o_ref,
    #     no scratch) with multiple M tiles and multiple reduction chunks.
    out_s = jax.block_until_ready(
        mlp_pallas(x, w1, b1, w2, b2, mode="stream", tm=16, th=128))
    assert out_s.shape == (B, N, C)
    assert jnp.allclose(out_s, ref, atol=1e-5, rtol=1e-5)

    # (3) bf16 streaming path: exercises the f32 scratch-accumulator kernel and
    #     the bf16 MXU operand path.
    xb, w1b, b1b, w2b, b2b = (a.astype(jnp.bfloat16) for a in (x, w1, b1, w2, b2))
    ref_b = mlp_reference(xb, w1b, b1b, w2b, b2b)
    out_b = jax.block_until_ready(
        mlp_pallas(xb, w1b, b1b, w2b, b2b, mode="stream", tm=16, th=128))
    assert out_b.shape == (B, N, C)
    assert jnp.allclose(out_b.astype(jnp.float32), ref_b, atol=3e-2, rtol=3e-2)

    print("KERNEL_OK")
</pallas_src>

<mosaic_0001>
module attributes {stable_mosaic.version = 11 : i64} {
  func.func @_mlp_resident_kernel(%arg0: i32, %arg1: memref<16x128xf32, #tpu.memory_space<vmem>>, %arg2: memref<128x256xf32, #tpu.memory_space<vmem>>, %arg3: memref<1x256xf32, #tpu.memory_space<vmem>>, %arg4: memref<256x128xf32, #tpu.memory_space<vmem>>, %arg5: memref<1x128xf32, #tpu.memory_space<vmem>>, %arg6: memref<16x128xf32, #tpu.memory_space<vmem>>) attributes {dimension_semantics = [#tpu.dimension_semantics<parallel>], iteration_bounds = array<i64: 2>, scalar_prefetch = 0 : i64, scratch_operands = 0 : i64, tpu.core_type = #tpu.core_type<tc>, window_params = [{transform_indices = @transform_0, window_bounds = array<i64: 16, 128>}, {pipeline_mode = #tpu.pipeline_mode<synchronous>, transform_indices = @transform_1, window_bounds = array<i64: 128, 256>}, {pipeline_mode = #tpu.pipeline_mode<synchronous>, transform_indices = @transform_2, window_bounds = array<i64: 1, 256>}, {pipeline_mode = #tpu.pipeline_mode<synchronous>, transform_indices = @transform_3, window_bounds = array<i64: 256, 128>}, {pipeline_mode = #tpu.pipeline_mode<synchronous>, transform_indices = @transform_4, window_bounds = array<i64: 1, 128>}, {transform_indices = @transform_5, window_bounds = array<i64: 16, 128>}]} {
    %c0 = arith.constant 0 : index
    %c0_0 = arith.constant 0 : index
    %0 = vector.load %arg1[%c0, %c0_0] : memref<16x128xf32, #tpu.memory_space<vmem>>, vector<16x128xf32>
    %c0_1 = arith.constant 0 : index
    %c0_2 = arith.constant 0 : index
    %1 = vector.load %arg2[%c0_1, %c0_2] : memref<128x256xf32, #tpu.memory_space<vmem>>, vector<128x256xf32>
    %cst = arith.constant dense<0.000000e+00> : vector<16x256xf32>
    %2 = tpu.matmul %0, %1, %cst {dimension_numbers = #tpu.dot_dimension_numbers<[1], [0], [0], [1], [0, 0, 1, 1], [], []>} : vector<16x128xf32>, vector<128x256xf32>, vector<16x256xf32> -> vector<16x256xf32>
    %c0_3 = arith.constant 0 : index
    %c0_4 = arith.constant 0 : index
    %3 = vector.load %arg3[%c0_3, %c0_4] : memref<1x256xf32, #tpu.memory_space<vmem>>, vector<1x256xf32>
    %4 = vector.broadcast %3 : vector<1x256xf32> to vector<16x256xf32>
    %5 = arith.addf %2, %4 : vector<16x256xf32>
    %cst_5 = arith.constant 5.000000e-01 : f32
    %6 = vector.broadcast %cst_5 : f32 to vector<16x256xf32>
    %7 = arith.mulf %6, %5 : vector<16x256xf32>
    %cst_6 = arith.constant 0.707106769 : f32
    %8 = vector.broadcast %cst_6 : f32 to vector<16x256xf32>
    %9 = arith.mulf %5, %8 : vector<16x256xf32>
    %10 = math.erf %9 : vector<16x256xf32>
    %cst_7 = arith.constant 1.000000e+00 : f32
    %11 = vector.broadcast %cst_7 : f32 to vector<16x256xf32>
    %12 = arith.addf %11, %10 : vector<16x256xf32>
    %13 = arith.mulf %7, %12 : vector<16x256xf32>
    %c0_8 = arith.constant 0 : index
    %c0_9 = arith.constant 0 : index
    %14 = vector.load %arg4[%c0_8, %c0_9] : memref<256x128xf32, #tpu.memory_space<vmem>>, vector<256x128xf32>
    %cst_10 = arith.constant dense<0.000000e+00> : vector<16x128xf32>
    %15 = tpu.matmul %13, %14, %cst_10 {dimension_numbers = #tpu.dot_dimension_numbers<[1], [0], [0], [1], [0, 0, 1, 1], [], []>} : vector<16x256xf32>, vector<256x128xf32>, vector<16x128xf32> -> vector<16x128xf32>
    %c0_11 = arith.constant 0 : index
    %c0_12 = arith.constant 0 : index
    %16 = vector.load %arg5[%c0_11, %c0_12] : memref<1x128xf32, #tpu.memory_space<vmem>>, vector<1x128xf32>
    %17 = vector.broadcast %16 : vector<1x128xf32> to vector<16x128xf32>
    %18 = arith.addf %15, %17 : vector<16x128xf32>
    %c0_13 = arith.constant 0 : index
    %c0_14 = arith.constant 0 : index
    %19 = vector.load %arg6[%c0_13, %c0_14] : memref<16x128xf32, #tpu.memory_space<vmem>>, vector<16x128xf32>
    tpu.vector_store %arg6[%c0_13, %c0_14], %18 {strides = array<i32>} : memref<16x128xf32, #tpu.memory_space<vmem>>, vector<16x128xf32>,
    return
  }
  func.func @transform_0(%arg0: i32) -> (i32, i32) {
    %c0_i32 = arith.constant 0 : i32
    %c0_i32_0 = arith.constant 0 : i32
    return %arg0, %c0_i32 : i32, i32
  }
  func.func @transform_1(%arg0: i32) -> (i32, i32) {
    %c0_i32 = arith.constant 0 : i32
    %c0_i32_0 = arith.constant 0 : i32
    %c0_i32_1 = arith.constant 0 : i32
    return %c0_i32, %c0_i32_0 : i32, i32
  }
  func.func @transform_2(%arg0: i32) -> (i32, i32) {
    %c0_i32 = arith.constant 0 : i32
    %c0_i32_0 = arith.constant 0 : i32
    %c0_i32_1 = arith.constant 0 : i32
    return %c0_i32, %c0_i32_0 : i32, i32
  }
  func.func @transform_3(%arg0: i32) -> (i32, i32) {
    %c0_i32 = arith.constant 0 : i32
    %c0_i32_0 = arith.constant 0 : i32
    %c0_i32_1 = arith.constant 0 : i32
    return %c0_i32, %c0_i32_0 : i32, i32
  }
  func.func @transform_4(%arg0: i32) -> (i32, i32) {
    %c0_i32 = arith.constant 0 : i32
    %c0_i32_0 = arith.constant 0 : i32
    %c0_i32_1 = arith.constant 0 : i32
    return %c0_i32, %c0_i32_0 : i32, i32
  }
  func.func @transform_5(%arg0: i32) -> (i32, i32) {
    %c0_i32 = arith.constant 0 : i32
    %c0_i32_0 = arith.constant 0 : i32
    return %arg0, %c0_i32 : i32, i32
  }
}

</mosaic_0001>

<llo_original>
// kernel: tpu_custom_call.1
$region0: #{tpu_custom_call.1}
  #allocation0 [shape = 'u32[]', space=smem, size = 0x4, offset = 0x4, fixed_abs, tag = 'smem constant byte address 0x4 - core index']
  #allocation1 [shape = 'u32[144,128]{1,0:T(1,128)}', space=vmem, size = 0x12000, scoped, tag = 'internal scratch']
  %s0 = inlined_call_operand.hbm [shape: f32[32,128], index: 0, kind: input, shape index: {}]
  %s1 = inlined_call_operand.hbm [shape: f32[128,256], index: 1, kind: input, shape index: {}]
  %s2 = inlined_call_operand.vmem [shape: f32[1,256], index: 2, kind: input, shape index: {}]
  %s3 = inlined_call_operand.hbm [shape: f32[256,128], index: 3, kind: input, shape index: {}]
  %s4 = inlined_call_operand.vmem [shape: f32[1,128], index: 4, kind: input, shape index: {}]
  %s5 = inlined_call_operand.hbm [shape: f32[32,128], index: 5, kind: output, shape index: {}]
  %s6 = sld [smem:[#allocation0]]
  $region65: #{tpu_custom_call.1} parent=0
    _
  %s8 = ssub.s32 1, %s6
  %s9 = scalar_select 0, %s8, %s6
  $region1: #{tpu_custom_call.1} parent=0
    #allocation2 [shape = 'u8[16384]{0}', space=vmem, size = 0x4000, scoped, tag = 'input window, operand 0']
    #allocation3 [shape = 's32[2]{0}', space=sflag, size = 0x8, scoped, tag = 'scoped memory for tpu_custom_call.1']
    #allocation4 [shape = 's32[2]{0}', space=sflag, size = 0x8, scoped, tag = 'scoped memory for tpu_custom_call.1']
    #allocation5 [shape = 'u8[131072]{0}', space=vmem, size = 0x20000, scoped, tag = 'input window, operand 1, single buffered']
    #allocation6 [shape = 's32[1]{0}', space=sflag, size = 0x4, scoped, tag = 'scoped memory for tpu_custom_call.1']
    #allocation7 [shape = 'u8[131072]{0}', space=vmem, size = 0x20000, scoped, tag = 'input window, operand 3, single buffered']
    #allocation8 [shape = 'u8[16384]{0}', space=vmem, size = 0x4000, scoped, tag = 'output window, operand 0']
    %10 = vsyncpa [#allocation3], 0
    %s11 = scalar_lea.sflag [#allocation3], 1
    %12 = vsyncpa %s11, 0
    %13 = vsyncpa [#allocation6], 0
    %14 = vsyncpa [#allocation4], 0
    %s15 = scalar_lea.sflag [#allocation4], 1
    %16 = vsyncpa %s15, 0
    loop: start=0, step=1, limit=4
    $region2: #{tpu_custom_call.1} parent=1 // loop_pre_header
      _
    $region3: #{tpu_custom_call.1} parent=1 // loop_header
      %s18 = sphi 0, %s22
      %p19 = scmp.ge.s32.totalorder %s18, 4
      %s28 = sphi 0, %s30
      %s31 = sphi 0, %s28
      %s32 = sphi 0, %s31
      %s48 = sphi 0, %s32
      %s52 = sphi 0, %s52
      %s54 = sphi 0, %s52
      %s55 = sphi 0, %s54
      %s69 = sphi 0, %s55
      %s73 = sphi 0, %s73
      %s75 = sphi 0, %s73
      %s76 = sphi 0, %s75
      %s90 = sphi 0, %s76
      %s94 = sphi 0, %s94
      %s96 = sphi 0, %s94
      %s97 = sphi 0, %s96
      %s111 = sphi 0, %s97
      %s115 = sphi 0, %s115
      %s117 = sphi 0, %s115
      %s118 = sphi 0, %s117
      %s132 = sphi 0, %s118
      %s138 = sphi 0, %s140
      %s141 = sphi 0, %s138
      %s142 = sphi 0, %s141
      %s158 = sphi 0, %s142
    $region4: #{tpu_custom_call.1} parent=1 // loop_header_branch
      %21 = sbr.rel (%p19) target = $region8
    $region5: #{tpu_custom_call.1} parent=1 // loop_body
      %s23 = ssub.s32 %s18, 1
      %s24 = ssub.s32 %s18, 2
      %s25 = sadd.s32 %s18, 1
      %s26 = ssub.s32 %s18, %s25
      %p27 = scmp.eq.s32.totalorder %s26, 0
      %s29 = sadd.s32 %s28, 1
      %s30 = scalar_select %p27, %s28, %s29
      %p33 = pneg %p27
      %p34 = scmp.eq.s32.totalorder %s18, 1
      %p35 = por %p33, %p34
      %p36 = scmp.ne.s32.totalorder %s28, %s31
      %p37 = scmp.eq.s32.totalorder %s18, 0
      %p38 = por %p36, %p37
      %p39 = scmp.ne.s32.totalorder %s28, %s31
      %p40 = scmp.eq.s32.totalorder %s23, 1
      %p41 = por %p39, %p40
      %p42 = scmp.ne.s32.totalorder %s31, %s32
      %p43 = scmp.eq.s32.totalorder %s23, 0
      %p44 = por %p42, %p43
      %p45 = scmp.ne.s32.totalorder %s31, %s32
      %p46 = scmp.eq.s32.totalorder %s24, 1
      %p47 = por %p45, %p46
      %p49 = scmp.ne.s32.totalorder %s32, %s48
      %p50 = scmp.eq.s32.totalorder %s24, 0
      %p51 = por %p49, %p50
      %s53 = sadd.s32 %s52, 1
      %p56 = scmp.eq.s32.totalorder %s18, 1
      %p57 = scmp.ne.s32.totalorder %s52, %s54
      %p58 = scmp.eq.s32.totalorder %s18, 0
      %p59 = por %p57, %p58
      %p60 = scmp.ne.s32.totalorder %s52, %s54
      %p61 = scmp.eq.s32.totalorder %s23, 1
      %p62 = por %p60, %p61
      %p63 = scmp.ne.s32.totalorder %s54, %s55
      %p64 = scmp.eq.s32.totalorder %s23, 0
      %p65 = por %p63, %p64
      %p66 = scmp.ne.s32.totalorder %s54, %s55
      %p67 = scmp.eq.s32.totalorder %s24, 1
      %p68 = por %p66, %p67
      %p70 = scmp.ne.s32.totalorder %s55, %s69
      %p71 = scmp.eq.s32.totalorder %s24, 0
      %p72 = por %p70, %p71
      %s74 = sadd.s32 %s73, 1
      %p77 = scmp.eq.s32.totalorder %s18, 1
      %p78 = scmp.ne.s32.totalorder %s73, %s75
      %p79 = scmp.eq.s32.totalorder %s18, 0
      %p80 = por %p78, %p79
      %p81 = scmp.ne.s32.totalorder %s73, %s75
      %p82 = scmp.eq.s32.totalorder %s23, 1
      %p83 = por %p81, %p82
      %p84 = scmp.ne.s32.totalorder %s75, %s76
      %p85 = scmp.eq.s32.totalorder %s23, 0
      %p86 = por %p84, %p85
      %p87 = scmp.ne.s32.totalorder %s75, %s76
      %p88 = scmp.eq.s32.totalorder %s24, 1
      %p89 = por %p87, %p88
      %p91 = scmp.ne.s32.totalorder %s76, %s90
      %p92 = scmp.eq.s32.totalorder %s24, 0
      %p93 = por %p91, %p92
      %s95 = sadd.s32 %s94, 1
      %p98 = scmp.eq.s32.totalorder %s18, 1
      %p99 = scmp.ne.s32.totalorder %s94, %s96
      %p100 = scmp.eq.s32.totalorder %s18, 0
      %p101 = por %p99, %p100
      %p102 = scmp.ne.s32.totalorder %s94, %s96
      %p103 = scmp.eq.s32.totalorder %s23, 1
      %p104 = por %p102, %p103
      %p105 = scmp.ne.s32.totalorder %s96, %s97
      %p106 = scmp.eq.s32.totalorder %s23, 0
      %p107 = por %p105, %p106
      %p108 = scmp.ne.s32.totalorder %s96, %s97
      %p109 = scmp.eq.s32.totalorder %s24, 1
      %p110 = por %p108, %p109
      %p112 = scmp.ne.s32.totalorder %s97, %s111
      %p113 = scmp.eq.s32.totalorder %s24, 0
      %p114 = por %p112, %p113
      %s116 = sadd.s32 %s115, 1
      %p119 = scmp.eq.s32.totalorder %s18, 1
      %p120 = scmp.ne.s32.totalorder %s115, %s117
      %p121 = scmp.eq.s32.totalorder %s18, 0
      %p122 = por %p120, %p121
      %p123 = scmp.ne.s32.totalorder %s115, %s117
      %p124 = scmp.eq.s32.totalorder %s23, 1
      %p125 = por %p123, %p124
      %p126 = scmp.ne.s32.totalorder %s117, %s118
      %p127 = scmp.eq.s32.totalorder %s23, 0
      %p128 = por %p126, %p127
      %p129 = scmp.ne.s32.totalorder %s117, %s118
      %p130 = scmp.eq.s32.totalorder %s24, 1
      %p131 = por %p129, %p130
      %p133 = scmp.ne.s32.totalorder %s118, %s132
      %p134 = scmp.eq.s32.totalorder %s24, 0
      %p135 = por %p133, %p134
      %s136 = ssub.s32 %s18, %s25
      %p137 = scmp.eq.s32.totalorder %s136, 0
      %s139 = sadd.s32 %s138, 1
      %s140 = scalar_select %p137, %s138, %s139
      %p143 = pneg %p137
      %p144 = scmp.eq.s32.totalorder %s18, 1
      %p145 = por %p143, %p144
      %p146 = scmp.ne.s32.totalorder %s138, %s141
      %p147 = scmp.eq.s32.totalorder %s18, 0
      %p148 = por %p146, %p147
      %p149 = scmp.ne.s32.totalorder %s138, %s141
      %p150 = scmp.eq.s32.totalorder %s23, 1
      %p151 = por %p149, %p150
      %p152 = scmp.ne.s32.totalorder %s141, %s142
      %p153 = scmp.eq.s32.totalorder %s23, 0
      %p154 = por %p152, %p153
      %p155 = scmp.ne.s32.totalorder %s141, %s142
      %p156 = scmp.eq.s32.totalorder %s24, 1
      %p157 = por %p155, %p156
      %p159 = scmp.ne.s32.totalorder %s142, %s158
      %p160 = scmp.eq.s32.totalorder %s24, 0
      %p161 = por %p159, %p160
      %p162 = scmp.le.s32.totalorder 1, %s18
      %p163 = scmp.lt.s32.totalorder %s18, 3
      %p164 = pnand %p162, %p163
      %p165 = pneg %p164
      // Predicated region
      $region9: #{tpu_custom_call.1} parent=5 // pred_check
        _
      $region10: #{tpu_custom_call.1} parent=5 // pred_check_branch
        %167 = sbr.rel (%p164) target = $region12
      $region11: #{tpu_custom_call.1} parent=5 // pred_region
        %s168 = ssub.s32 %s18, 1
        // Predicated region
        $region13: #{tpu_custom_call.1} parent=11 // pred_check
          %p169 = pneg %p65
        $region14: #{tpu_custom_call.1} parent=11 // pred_check_branch
          %171 = sbr.rel (%p169) target = $region16
        $region15: #{tpu_custom_call.1} parent=11 // pred_region
          %s173 = ssub.s32 4096, 4096
          %174 = vsyncadd [#allocation6], %s173
          %s175 = sshll.u32 [#allocation5], 4
          %s176 = int_to_ptr.vmem [resolvable:$true] %s175
          %181 = dma.hbm_to_vmem [thread:$0]  %s1, 4096, %s176, [#allocation6], 256, 256, 16
        $region16: #{tpu_custom_call.1} parent=11 // pred_fallthru
          _
        // Predicated region
        $region17: #{tpu_custom_call.1} parent=11 // pred_check
          %p182 = pneg %p86
        $region18: #{tpu_custom_call.1} parent=11 // pred_check_branch
          %184 = sbr.rel (%p182) target = $region20
        $region19: #{tpu_custom_call.1} parent=11 // pred_region
          _
        $region20: #{tpu_custom_call.1} parent=11 // pred_fallthru
          _
        // Predicated region
        $region21: #{tpu_custom_call.1} parent=11 // pred_check
          %p185 = pneg %p107
        $region22: #{tpu_custom_call.1} parent=11 // pred_check_branch
          %187 = sbr.rel (%p185) target = $region24
        $region23: #{tpu_custom_call.1} parent=11 // pred_region
          %s189 = ssub.s32 4096, 4096
          %190 = vsyncadd [#allocation6], %s189
          %s191 = sshll.u32 [#allocation7], 4
          %s192 = int_to_ptr.vmem [resolvable:$true] %s191
          %197 = dma.hbm_to_vmem [thread:$0]  %s3, 4096, %s192, [#allocation6], 128, 128, 8
        $region24: #{tpu_custom_call.1} parent=11 // pred_fallthru
          _
        // Predicated region
        $region25: #{tpu_custom_call.1} parent=11 // pred_check
          %p198 = pneg %p128
        $region26: #{tpu_custom_call.1} parent=11 // pred_check_branch
          %200 = sbr.rel (%p198) target = $region28
        $region27: #{tpu_custom_call.1} parent=11 // pred_region
          _
        $region28: #{tpu_custom_call.1} parent=11 // pred_fallthru
          _
      $region12: #{tpu_custom_call.1} parent=5 // pred_fallthru
        _
      %p201 = scmp.lt.s32.totalorder %s18, 2
      // Predicated region
      $region29: #{tpu_custom_call.1} parent=5 // pred_check
        %p202 = pneg %p201
      $region30: #{tpu_custom_call.1} parent=5 // pred_check_branch
        %204 = sbr.rel (%p202) target = $region32
      $region31: #{tpu_custom_call.1} parent=5 // pred_region
        // Predicated region
        $region33: #{tpu_custom_call.1} parent=31 // pred_check
          %p205 = pneg %p38
        $region34: #{tpu_custom_call.1} parent=31 // pred_check_branch
          %207 = sbr.rel (%p205) target = $region36
        $region35: #{tpu_custom_call.1} parent=31 // pred_region
          %s208 = sand.u32 %s28, 1
          %s209 = scalar_lea.sflag [#allocation3], %s208
          %s210 = sand.u32 %s28, 1
          %s211 = smul.addr %s210, 16
          %s212 = scalar_lea.vmem [#allocation2], %s211
          %s213 = smul.u32 2, %s18
          %s215 = ssub.s32 256, 256
          %216 = vsyncadd %s209, %s215
          %s217 = smul.addr %s213, 128
          %s218 = scalar_lea.hbm %s0, %s217
          %s219 = sshll.u32 %s212, 4
          %s220 = int_to_ptr.vmem [resolvable:$true] %s219
          %225 = dma.hbm_to_vmem [thread:$0]  %s218, 256, %s220, %s209, 128, 128, 8
        $region36: #{tpu_custom_call.1} parent=31 // pred_fallthru
          _
      $region32: #{tpu_custom_call.1} parent=5 // pred_fallthru
        _
      %p226 = scmp.le.s32.totalorder 1, %s18
      %p227 = scmp.lt.s32.totalorder %s18, 3
      %p228 = pnand %p226, %p227
      %p229 = pneg %p228
      // Predicated region
      $region37: #{tpu_custom_call.1} parent=5 // pred_check
        _
      $region38: #{tpu_custom_call.1} parent=5 // pred_check_branch
        %231 = sbr.rel (%p228) target = $region40
      $region39: #{tpu_custom_call.1} parent=5 // pred_region
        %s232 = ssub.s32 %s18, 1
        %s233 = sand.u32 %s31, 1
        %s234 = scalar_lea.sflag [#allocation3], %s233
        %s235 = sand.u32 %s31, 1
        %s236 = smul.addr %s235, 16
        %s237 = scalar_lea.vmem [#allocation2], %s236
        // Predicated region
        $region41: #{tpu_custom_call.1} parent=39 // pred_check
          %p238 = pneg %p44
        $region42: #{tpu_custom_call.1} parent=39 // pred_check_branch
          %240 = sbr.rel (%p238) target = $region44
        $region43: #{tpu_custom_call.1} parent=39 // pred_region
          %241 = dma.done %s234, 256
        $region44: #{tpu_custom_call.1} parent=39 // pred_fallthru
          _
        // Predicated region
        $region45: #{tpu_custom_call.1} parent=39 // pred_check
          %p242 = pneg %p65
        $region46: #{tpu_custom_call.1} parent=39 // pred_check_branch
          %244 = sbr.rel (%p242) target = $region48
        $region47: #{tpu_custom_call.1} parent=39 // pred_region
          %245 = dma.done [#allocation6], 4096
        $region48: #{tpu_custom_call.1} parent=39 // pred_fallthru
          _
        // Predicated region
        $region49: #{tpu_custom_call.1} parent=39 // pred_check
          %p246 = pneg %p107
        $region50: #{tpu_custom_call.1} parent=39 // pred_check_branch
          %248 = sbr.rel (%p246) target = $region52
        $region51: #{tpu_custom_call.1} parent=39 // pred_region
          %249 = dma.done [#allocation6], 4096
        $region52: #{tpu_custom_call.1} parent=39 // pred_fallthru
          _
        %s250 = sand.u32 %s31, 1
        %s251 = scalar_lea.sflag [#allocation3], %s250
        %s252 = sand.u32 %s31, 1
        %s253 = smul.addr %s252, 16
        %s254 = scalar_lea.vmem [#allocation2], %s253
        %p255 = pneg %p44
        %p256 = pneg %p41
        %p257 = pneg %p65
        %p258 = pneg %p62
        %p259 = pneg %p86
        %p260 = pneg %p83
        %p261 = pneg %p107
        %p262 = pneg %p104
        %p263 = pneg %p128
        %p264 = pneg %p125
        %p265 = pneg %p154
        %p266 = pneg %p151
        %s267 = sand.u32 %s141, 1
        %s268 = scalar_lea.sflag [#allocation4], %s267
        %s269 = sand.u32 %s141, 1
        %s270 = smul.addr %s269, 16
        %s271 = scalar_lea.vmem [#allocation8], %s270
        %s272 = smul.u32 2, %s23
        %s273 = smul.u32 2, %s23
        %v274 = vld [vmem:[%s237] sm:$0xff]
        %v275 = vld [vmem:[%s237 + $0x8] sm:$0xff]
        %v276 = vld [vmem:[#allocation5] sm:$0xff]
        %v277 = vld [vmem:[#allocation5 + $0x8] sm:$0xff]
        %v278 = vld [vmem:[#allocation5 + $0x10] sm:$0xff]
        %v279 = vld [vmem:[#allocation5 + $0x18] sm:$0xff]
        %v280 = vld [vmem:[#allocation5 + $0x20] sm:$0xff]
        %v281 = vld [vmem:[#allocation5 + $0x28] sm:$0xff]
        %v282 = vld [vmem:[#allocation5 + $0x30] sm:$0xff]
        %v283 = vld [vmem:[#allocation5 + $0x38] sm:$0xff]
        %v284 = vld [vmem:[#allocation5 + $0x40] sm:$0xff]
        %v285 = vld [vmem:[#allocation5 + $0x48] sm:$0xff]
        %v286 = vld [vmem:[#allocation5 + $0x50] sm:$0xff]
        %v287 = vld [vmem:[#allocation5 + $0x58] sm:$0xff]
        %v288 = vld [vmem:[#allocation5 + $0x60] sm:$0xff]
        %v289 = vld [vmem:[#allocation5 + $0x68] sm:$0xff]
        %v290 = vld [vmem:[#allocation5 + $0x70] sm:$0xff]
        %v291 = vld [vmem:[#allocation5 + $0x78] sm:$0xff]
        %v292 = vld [vmem:[#allocation5 + $0x80] sm:$0xff]
        %v293 = vld [vmem:[#allocation5 + $0x88] sm:$0xff]
        %v294 = vld [vmem:[#allocation5 + $0x90] sm:$0xff]
        %v295 = vld [vmem:[#allocation5 + $0x98] sm:$0xff]
        %v296 = vld [vmem:[#allocation5 + $0xa0] sm:$0xff]
        %v297 = vld [vmem:[#allocation5 + $0xa8] sm:$0xff]
        %v298 = vld [vmem:[#allocation5 + $0xb0] sm:$0xff]
        %v299 = vld [vmem:[#allocation5 + $0xb8] sm:$0xff]
        %v300 = vld [vmem:[#allocation5 + $0xc0] sm:$0xff]
        %v301 = vld [vmem:[#allocation5 + $0xc8] sm:$0xff]
        %v302 = vld [vmem:[#allocation5 + $0xd0] sm:$0xff]
        %v303 = vld [vmem:[#allocation5 + $0xd8] sm:$0xff]
        %v304 = vld [vmem:[#allocation5 + $0xe0] sm:$0xff]
        %v305 = vld [vmem:[#allocation5 + $0xe8] sm:$0xff]
        %v306 = vld [vmem:[#allocation5 + $0xf0] sm:$0xff]
        %v307 = vld [vmem:[#allocation5 + $0xf8] sm:$0xff]
        %v308 = vld [vmem:[%s2] sm:$0x3]
        %v310 = vlaneseq
        %v311 = vshrl.u32 %v310, 7
        %v312 = vsub.s32 0, %v311
        %v313 = vrot.slane %v308, %v312
        %v314 = vlaneseq
        %v315 = vshrl.u32 %v314, 7
        %v316 = vsub.s32 1, %v315
        %v317 = vrot.slane %v308, %v316
        %320 = vmatprep.subr.mxu0 %v307
        %321 = vmatpush1.msra.mxu0 %v306
        %322 = vmatprep.subr.mxu0 %v305
        %323 = vmatpush1.msra.mxu0 %v304
        %324 = vmatprep.subr.mxu0 %v303
        %325 = vmatpush1.msra.mxu0 %v302
        %326 = vmatprep.subr.mxu0 %v301
        %327 = vmatpush1.msra.mxu0 %v300
        %328 = vmatprep.subr.mxu0 %v299
        %329 = vmatpush1.msra.mxu0 %v298
        %330 = vmatprep.subr.mxu0 %v297
        %331 = vmatpush1.msra.mxu0 %v296
        %332 = vmatprep.subr.mxu0 %v295
        %333 = vmatpush1.msra.mxu0 %v294
        %334 = vmatprep.subr.mxu0 %v293
        %335 = vmatpush1.msra.mxu0 %v292
        %336 = vmatprep.subr.mxu0 %v291
        %337 = vmatpush1.msra.mxu0 %v290
        %338 = vmatprep.subr.mxu0 %v289
        %339 = vmatpush1.msra.mxu0 %v288
        %340 = vmatprep.subr.mxu0 %v287
        %341 = vmatpush1.msra.mxu0 %v286
        %342 = vmatprep.subr.mxu0 %v285
        %343 = vmatpush1.msra.mxu0 %v284
        %344 = vmatprep.subr.mxu0 %v283
        %345 = vmatpush1.msra.mxu0 %v282
        %346 = vmatprep.subr.mxu0 %v281
        %347 = vmatpush1.msra.mxu0 %v280
        %348 = vmatprep.subr.mxu0 %v279
        %349 = vmatpush1.msra.mxu0 %v278
        %350 = vmatprep.subr.mxu0 %v277
        %351 = vmatpush1.msra.mxu0 %v276
        %352 = vmatprep.subr.mxu0 0.0
        %353 = vmatpush2.msra.mxu0 0.0
        %354 = vmatprep.subr.mxu0 0.0
        %355 = vmatpush2.msra.mxu0 0.0
        %356 = vmatprep.subr.mxu0 0.0
        %357 = vmatpush2.msra.mxu0 0.0
        %358 = vmatprep.subr.mxu0 0.0
        %359 = vmatpush2.msra.mxu0 0.0
        %360 = vmatprep.subr.mxu0 0.0
        %361 = vmatpush2.msra.mxu0 0.0
        %362 = vmatprep.subr.mxu0 0.0
        %363 = vmatpush2.msra.mxu0 0.0
        %364 = vmatprep.subr.mxu0 0.0
        %365 = vmatpush2.msra.mxu0 0.0
        %366 = vmatprep.subr.mxu0 0.0
        %367 = vmatpush2.msra.mxu0 0.0
        %368 = vmatprep.subr.mxu0 0.0
        %369 = vmatpush2.msra.mxu0 0.0
        %370 = vmatprep.subr.mxu0 0.0
        %371 = vmatpush2.msra.mxu0 0.0
        %372 = vmatprep.subr.mxu0 0.0
        %373 = vmatpush2.msra.mxu0 0.0
        %374 = vmatprep.subr.mxu0 0.0
        %375 = vmatpush2.msra.mxu0 0.0
        %376 = vmatprep.subr.mxu0 0.0
        %377 = vmatpush2.msra.mxu0 0.0
        %378 = vmatprep.subr.mxu0 0.0
        %379 = vmatpush2.msra.mxu0 0.0
        %380 = vmatprep.subr.mxu0 0.0
        %381 = vmatpush2.msra.mxu0 0.0
        %382 = vmatprep.subr.mxu0 0.0
        %383 = vmatpush2.msra.mxu0 0.0
        %384 = vmatprep.mubr.f32.mxu0 0.0
        %385 = vmatmul.mubr.f32.gmra.mxu0 %v274
        %v386 = vpop.f32.mrf.mxu0
        %v387 = vadd.f32 %v313, %v386
        %v388 = vpop.f32.mrf.mxu0
        %v389 = vadd.f32 %v317, %v388
        %390 = vmatprep.mubr.f32.mxu0 0.0
        %391 = vmatmul.mubr.f32.gmra.mxu0 %v275
        %v392 = vpop.f32.mrf.mxu0
        %v393 = vadd.f32 %v313, %v392
        %v394 = vpop.f32.mrf.mxu0
        %v395 = vadd.f32 %v317, %v394
        %396 = vdwg.mxu0
        %v397 = vmul.f32 %v387, 0.5
        %v398 = vmul.f32 %v389, 0.5
        %v399 = vmul.f32 %v393, 0.5
        %v400 = vmul.f32 %v395, 0.5
        %v401 = vmul.f32 %v387, 0.70710677
        %v402 = vmul.f32 %v389, 0.70710677
        %v403 = vmul.f32 %v393, 0.70710677
        %v404 = vmul.f32 %v395, 0.70710677
        %v405 = verf.f32.pop %v401
        %v406 = verf.f32.pop %v402
        %v407 = verf.f32.pop %v403
        %v408 = verf.f32.pop %v404
        %v409 = vadd.f32 %v405, 1.0
        %v410 = vadd.f32 %v406, 1.0
        %v411 = vadd.f32 %v407, 1.0
        %v412 = vadd.f32 %v408, 1.0
        %v413 = vmul.f32 %v397, %v409
        %v414 = vmul.f32 %v398, %v410
        %v415 = vmul.f32 %v399, %v411
        %v416 = vmul.f32 %v400, %v412
        %v417 = vld [vmem:[#allocation7] sm:$0xff]
        %v418 = vld [vmem:[#allocation7 + $0x8] sm:$0xff]
        %v419 = vld [vmem:[#allocation7 + $0x10] sm:$0xff]
        %v420 = vld [vmem:[#allocation7 + $0x18] sm:$0xff]
        %v421 = vld [vmem:[#allocation7 + $0x20] sm:$0xff]
        %v422 = vld [vmem:[#allocation7 + $0x28] sm:$0xff]
        %v423 = vld [vmem:[#allocation7 + $0x30] sm:$0xff]
        %v424 = vld [vmem:[#allocation7 + $0x38] sm:$0xff]
        %v425 = vld [vmem:[#allocation7 + $0x40] sm:$0xff]
        %v426 = vld [vmem:[#allocation7 + $0x48] sm:$0xff]
        %v427 = vld [vmem:[#allocation7 + $0x50] sm:$0xff]
        %v428 = vld [vmem:[#allocation7 + $0x58] sm:$0xff]
        %v429 = vld [vmem:[#allocation7 + $0x60] sm:$0xff]
        %v430 = vld [vmem:[#allocation7 + $0x68] sm:$0xff]
        %v431 = vld [vmem:[#allocation7 + $0x70] sm:$0xff]
        %v432 = vld [vmem:[#allocation7 + $0x78] sm:$0xff]
        %v433 = vld [vmem:[#allocation7 + $0x80] sm:$0xff]
        %v434 = vld [vmem:[#allocation7 + $0x88] sm:$0xff]
        %v435 = vld [vmem:[#allocation7 + $0x90] sm:$0xff]
        %v436 = vld [vmem:[#allocation7 + $0x98] sm:$0xff]
        %v437 = vld [vmem:[#allocation7 + $0xa0] sm:$0xff]
        %v438 = vld [vmem:[#allocation7 + $0xa8] sm:$0xff]
        %v439 = vld [vmem:[#allocation7 + $0xb0] sm:$0xff]
        %v440 = vld [vmem:[#allocation7 + $0xb8] sm:$0xff]
        %v441 = vld [vmem:[#allocation7 + $0xc0] sm:$0xff]
        %v442 = vld [vmem:[#allocation7 + $0xc8] sm:$0xff]
        %v443 = vld [vmem:[#allocation7 + $0xd0] sm:$0xff]
        %v444 = vld [vmem:[#allocation7 + $0xd8] sm:$0xff]
        %v445 = vld [vmem:[#allocation7 + $0xe0] sm:$0xff]
        %v446 = vld [vmem:[#allocation7 + $0xe8] sm:$0xff]
        %v447 = vld [vmem:[#allocation7 + $0xf0] sm:$0xff]
        %v448 = vld [vmem:[#allocation7 + $0xf8] sm:$0xff]
        %v449 = vld [vmem:[%s4] sm:$0x1]
        %v451 = vlaneseq
        %v452 = vshrl.u32 %v451, 7
        %v453 = vsub.s32 0, %v452
        %v454 = vrot.slane %v449, %v453
        %456 = vmatprep.subr.mxu0 0.0
        %457 = vmatpush1.msra.mxu0 %v432
        %458 = vmatprep.subr.mxu0 0.0
        %459 = vmatpush1.msra.mxu0 %v431
        %460 = vmatprep.subr.mxu0 0.0
        %461 = vmatpush1.msra.mxu0 %v430
        %462 = vmatprep.subr.mxu0 0.0
        %463 = vmatpush1.msra.mxu0 %v429
        %464 = vmatprep.subr.mxu0 0.0
        %465 = vmatpush1.msra.mxu0 %v428
        %466 = vmatprep.subr.mxu0 0.0
        %467 = vmatpush1.msra.mxu0 %v427
        %468 = vmatprep.subr.mxu0 0.0
        %469 = vmatpush1.msra.mxu0 %v426
        %470 = vmatprep.subr.mxu0 0.0
        %471 = vmatpush1.msra.mxu0 %v425
        %472 = vmatprep.subr.mxu0 0.0
        %473 = vmatpush1.msra.mxu0 %v424
        %474 = vmatprep.subr.mxu0 0.0
        %475 = vmatpush1.msra.mxu0 %v423
        %476 = vmatprep.subr.mxu0 0.0
        %477 = vmatpush1.msra.mxu0 %v422
        %478 = vmatprep.subr.mxu0 0.0
        %479 = vmatpush1.msra.mxu0 %v421
        %480 = vmatprep.subr.mxu0 0.0
        %481 = vmatpush1.msra.mxu0 %v420
        %482 = vmatprep.subr.mxu0 0.0
        %483 = vmatpush1.msra.mxu0 %v419
        %484 = vmatprep.subr.mxu0 0.0
        %485 = vmatpush1.msra.mxu0 %v418
        %486 = vmatprep.subr.mxu0 0.0
        %487 = vmatpush1.msra.mxu0 %v417
        %488 = vmatprep.subr.mxu0 0.0
        %489 = vmatpush2.msra.mxu0 %v448
        %490 = vmatprep.subr.mxu0 0.0
        %491 = vmatpush2.msra.mxu0 %v447
        %492 = vmatprep.subr.mxu0 0.0
        %493 = vmatpush2.msra.mxu0 %v446
        %494 = vmatprep.subr.mxu0 0.0
        %495 = vmatpush2.msra.mxu0 %v445
        %496 = vmatprep.subr.mxu0 0.0
        %497 = vmatpush2.msra.mxu0 %v444
        %498 = vmatprep.subr.mxu0 0.0
        %499 = vmatpush2.msra.mxu0 %v443
        %500 = vmatprep.subr.mxu0 0.0
        %501 = vmatpush2.msra.mxu0 %v442
        %502 = vmatprep.subr.mxu0 0.0
        %503 = vmatpush2.msra.mxu0 %v441
        %504 = vmatprep.subr.mxu0 0.0
        %505 = vmatpush2.msra.mxu0 %v440
        %506 = vmatprep.subr.mxu0 0.0
        %507 = vmatpush2.msra.mxu0 %v439
        %508 = vmatprep.subr.mxu0 0.0
        %509 = vmatpush2.msra.mxu0 %v438
        %510 = vmatprep.subr.mxu0 0.0
        %511 = vmatpush2.msra.mxu0 %v437
        %512 = vmatprep.subr.mxu0 0.0
        %513 = vmatpush2.msra.mxu0 %v436
        %514 = vmatprep.subr.mxu0 0.0
        %515 = vmatpush2.msra.mxu0 %v435
        %516 = vmatprep.subr.mxu0 0.0
        %517 = vmatpush2.msra.mxu0 %v434
        %518 = vmatprep.subr.mxu0 0.0
        %519 = vmatpush2.msra.mxu0 %v433
        %520 = vmatprep.mubr.f32.mxu0 %v414
        %521 = vmatmul.mubr.f32.gmra.mxu0 %v413
        %v522 = vpop.f32.mrf.mxu0
        %v523 = vadd.f32 %v454, %v522
        %v524 = vpop.f32.mrf.mxu0
        %525 = vmatprep.mubr.f32.mxu0 %v416
        %526 = vmatmul.mubr.f32.gmra.mxu0 %v415
        %v527 = vpop.f32.mrf.mxu0
        %v528 = vadd.f32 %v454, %v527
        %v529 = vpop.f32.mrf.mxu0
        %530 = vdwg.mxu0
        %531 = vst [vmem:[%s271] sm:$0xff] %v523
        %532 = vst [vmem:[%s271 + $0x8] sm:$0xff] %v528
        %s533 = sand.u32 %s141, 1
        %s534 = scalar_lea.sflag [#allocation4], %s533
        %s535 = sand.u32 %s141, 1
        %s536 = smul.addr %s535, 16
        %s537 = scalar_lea.vmem [#allocation8], %s536
        // Predicated region
        $region53: #{tpu_custom_call.1} parent=39 // pred_check
          %p538 = pneg %p151
        $region54: #{tpu_custom_call.1} parent=39 // pred_check_branch
          %540 = sbr.rel (%p538) target = $region56
        $region55: #{tpu_custom_call.1} parent=39 // pred_region
          %s541 = smul.u32 2, %s23
          %s543 = ssub.s32 256, 256
          %544 = vsyncadd %s534, %s543
          %s545 = smul.addr %s541, 128
          %s546 = scalar_lea.hbm %s5, %s545
          %s547 = sshll.u32 %s537, 4
          %s548 = int_to_ptr.vmem [resolvable:$true] %s547
          %553 = dma.vmem_to_hbm [thread:$0]  %s548, 256, %s546, %s534, 128, 128, 8
        $region56: #{tpu_custom_call.1} parent=39 // pred_fallthru
          _
      $region40: #{tpu_custom_call.1} parent=5 // pred_fallthru
        _
      %p554 = scmp.le.s32.totalorder 2, %s18
      // Predicated region
      $region57: #{tpu_custom_call.1} parent=5 // pred_check
        %p555 = pneg %p554
      $region58: #{tpu_custom_call.1} parent=5 // pred_check_branch
        %557 = sbr.rel (%p555) target = $region60
      $region59: #{tpu_custom_call.1} parent=5 // pred_region
        %s558 = ssub.s32 %s18, 2
        // Predicated region
        $region61: #{tpu_custom_call.1} parent=59 // pred_check
          %p559 = pneg %p157
        $region62: #{tpu_custom_call.1} parent=59 // pred_check_branch
          %561 = sbr.rel (%p559) target = $region64
        $region63: #{tpu_custom_call.1} parent=59 // pred_region
          %s562 = sand.u32 %s142, 1
          %s563 = scalar_lea.sflag [#allocation4], %s562
          %s564 = sand.u32 %s142, 1
          %s565 = smul.addr %s564, 16
          %s566 = scalar_lea.vmem [#allocation8], %s565
          %567 = dma.done %s563, 256
        $region64: #{tpu_custom_call.1} parent=59 // pred_fallthru
          _
      $region60: #{tpu_custom_call.1} parent=5 // pred_fallthru
        _
    $region6: #{tpu_custom_call.1} parent=1 // loop_footer
      %s22 = sadd.s32 1, %s18
    $region7: #{tpu_custom_call.1} parent=1 // loop_footer_branch
      %17 = sbr.rel target = $region3
    $region8: #{tpu_custom_call.1} parent=1 // loop_exit
      _
    %568 = vsyncpa [#allocation3], 1
    %s569 = scalar_lea.sflag [#allocation3], 1
    %570 = vsyncpa %s569, 1
    %571 = vsyncpa [#allocation6], 1
    %572 = vsyncpa [#allocation4], 1
    %s573 = scalar_lea.sflag [#allocation4], 1
    %574 = vsyncpa %s573, 1

</llo_original>
